<compile_context>
chip_gen: v6e
topology: v6e:2x2x1
jax: 0.10.0
libtpu: 0.0.40
codegen_flags: <defaults>
</compile_context>

<pallas_src>
import functools

import jax
import jax.numpy as jnp
import numpy as np
from jax.experimental import pallas as pl
from jax.experimental.pallas import tpu as pltpu


_HIDDEN = 128  # padded feature width of the weight slab (one full lane dim)


def _round_up(x, m):
    return ((x + m - 1) // m) * m


def _mlp_kernel(x_ref, w_ref, b_ref, o_ref, *, layer_dims):
    """Fused 5-layer MLP on one (TM, in_features) batch tile.

    x_ref: (TM, in_features) float32     -- batch tile at native feature width
    w_ref: (L, 128, 128) compute dtype   -- zero-padded weight slab (resident)
    b_ref: (8, 128) float32              -- zero-padded bias slab (resident)
    o_ref: (TM, out_pad) float32         -- narrow, contiguous output tile
    layer_dims: static ((k0, n0), ...)   -- true fan_in/fan_out per layer
    """
    compute_dtype = w_ref.dtype
    num_layers = len(layer_dims)

    h = x_ref[...]  # activations stay f32 between layers
    for layer, (k, n) in enumerate(layer_dims):
        # Cast only the MXU operand; accumulate in f32.
        z = jnp.dot(
            h.astype(compute_dtype),
            w_ref[layer, :k, :n],            # sublane/lane-aligned VMEM view
            preferred_element_type=jnp.float32,
        )
        z = z + b_ref[layer:layer + 1, :n]   # f32 bias add (VPU)
        if layer < num_layers - 1:
            z = jnp.maximum(z, 0.0)          # f32 ReLU
        h = z
    o_ref[...] = h.astype(o_ref.dtype)


@functools.partial(jax.jit, static_argnames=("layer_dims", "block_batch"))
def _mlp_pallas(x, w_slab, b_slab, *, layer_dims, block_batch):
    batch, in_features = x.shape
    num_layers = len(layer_dims)
    assert layer_dims[0][0] == in_features
    out_features = layer_dims[-1][1]
    out_pad = _round_up(out_features, 8)
    padded_dims = layer_dims[:-1] + ((layer_dims[-1][0], out_pad),)

    # --- batch tiling -------------------------------------------------------
    tm = min(block_batch, _round_up(batch, 8))
    # If the whole batch fits one tile, split it in two so the "parallel"
    # batch axis can shard across both TensorCores on v7x.
    if tm > 8 and _round_up(batch, tm) == tm:
        tm = max(8, _round_up((batch + 1) // 2, 8))
    batch_pad = _round_up(batch, tm)
    num_blocks = batch_pad // tm

    # Pad only the batch axis (at most tm-1 rows) when not a tile multiple.
    if batch_pad != batch:
        x = jnp.pad(x, ((0, batch_pad - batch), (0, 0)))

    # --- cost / VMEM bookkeeping -------------------------------------------
    x_item = jnp.dtype(x.dtype).itemsize
    w_item = jnp.dtype(w_slab.dtype).itemsize
    flops = 2 * batch_pad * sum(k * n for k, n in padded_dims)
    bytes_accessed = (
        batch_pad * in_features * x_item       # x (native width, no pad copy)
        + w_slab.size * w_item                 # weight slab (read once)
        + b_slab.size * 4                      # bias slab (read once)
        + batch_pad * out_pad * 4              # narrow f32 output
    )
    vmem_bytes = (
        2 * tm * in_features * x_item          # double-buffered input tile
        + 2 * tm * out_pad * 4                 # double-buffered output tile
        + 2 * w_slab.size * w_item             # weight slab (+ spare buffer)
        + 2 * b_slab.size * 4                  # bias slab (+ spare buffer)
        + 6 * tm * _HIDDEN * 4                 # in-kernel f32 intermediates
    )
    vmem_limit = int(min(64 * 1024 * 1024, max(2 * vmem_bytes, 16 * 1024 * 1024)))

    grid_spec = pltpu.PrefetchScalarGridSpec(
        num_scalar_prefetch=0,
        grid=(num_blocks,),
        in_specs=[
            # Batch-tiled input at its native feature width (pipelined DMA).
            pl.BlockSpec((tm, in_features), lambda i: (i, 0)),
            # Weights / biases: constant block index -> resident in VMEM,
            # fetched once (no re-DMA across grid steps).
            pl.BlockSpec((num_layers, _HIDDEN, _HIDDEN), lambda i: (0, 0, 0)),
            pl.BlockSpec(b_slab.shape, lambda i: (0, 0)),
        ],
        # Narrow output tile: only out_pad (=8) f32 lanes per row, contiguous.
        out_specs=pl.BlockSpec((tm, out_pad), lambda i: (i, 0)),
    )

    kernel = functools.partial(_mlp_kernel, layer_dims=padded_dims)
    out_padded = pl.pallas_call(
        kernel,
        out_shape=jax.ShapeDtypeStruct((batch_pad, out_pad), jnp.float32),
        grid_spec=grid_spec,
        compiler_params=pltpu.CompilerParams(
            dimension_semantics=("parallel",),   # megacore sharding on v7x
            vmem_limit_bytes=vmem_limit,
        ),
        cost_estimate=pl.CostEstimate(
            flops=flops, transcendentals=0, bytes_accessed=bytes_accessed
        ),
    )(x, w_slab, b_slab)

    return out_padded[:batch, :out_features]


def pack_params(params, compute_dtype=jnp.bfloat16):
    """Pack the 5 (W, b) pairs into zero-padded slabs.

    W slab: (num_layers, 128, 128) in compute_dtype
    b slab: (8, 128) float32 (rows 0..4 hold the biases, rest zero)
    Also returns the true (fan_in, fan_out) per layer for in-kernel slicing.
    """
    num_layers = len(params)
    w_slab = jnp.zeros((num_layers, _HIDDEN, _HIDDEN), compute_dtype)
    b_slab = jnp.zeros((max(8, num_layers), _HIDDEN), jnp.float32)
    layer_dims = []
    for layer, (w, b) in enumerate(params):
        fan_in, fan_out = w.shape
        assert fan_in <= _HIDDEN and fan_out <= _HIDDEN
        w_slab = w_slab.at[layer, :fan_in, :fan_out].set(w.astype(compute_dtype))
        b_slab = b_slab.at[layer, :fan_out].set(
            jnp.reshape(b, (-1,)).astype(jnp.float32)
        )
        layer_dims.append((fan_in, fan_out))
    return w_slab, b_slab, tuple(layer_dims)


def enhanced_linear_regression_forward(
    x, params, compute_dtype=jnp.bfloat16, block_batch=2048
):
    """x: (B, input_size) f32; params: list of (W (in,out), b (1,out)) pairs."""
    assert x.shape[1] <= _HIDDEN, "see TODO(synk) at top of file"
    w_slab, b_slab, layer_dims = pack_params(params, compute_dtype)
    return _mlp_pallas(
        x, w_slab, b_slab, layer_dims=layer_dims, block_batch=block_batch
    )


def init_params(key, input_size):
    """Deterministic PyTorch-style init: U(-1/sqrt(fan_in), 1/sqrt(fan_in))."""
    sizes = [input_size, 128, 64, 32, 16, 2]
    params = []
    for fan_in, fan_out in zip(sizes[:-1], sizes[1:]):
        key, kw, kb = jax.random.split(key, 3)
        bound = 1.0 / jnp.sqrt(jnp.float32(fan_in))
        w = jax.random.uniform(kw, (fan_in, fan_out), jnp.float32, -bound, bound)
        b = jax.random.uniform(kb, (1, fan_out), jnp.float32, -bound, bound)
        params.append((w, b))
    return params


def reference_forward(x, params):
    """Host-side float64 reference (unambiguous ground truth)."""
    h = np.asarray(x, np.float64)
    for i, (w, b) in enumerate(params):
        h = h @ np.asarray(w, np.float64) + np.asarray(b, np.float64)
        if i < len(params) - 1:
            h = np.maximum(h, 0.0)
    return h


if __name__ == "__main__":
    key = jax.random.PRNGKey(0)
    key, kx = jax.random.split(key)

    batch = 8
    input_size = 32
    x = jax.random.normal(kx, (batch, input_size), jnp.float32)
    params = init_params(key, input_size)

    ref = reference_forward(x, params)

    # f32 compute path (tolerance covers TPU matmul rounding differences).
    out = enhanced_linear_regression_forward(x, params, compute_dtype=jnp.float32)
    out = jax.block_until_ready(out)
    assert out.shape == (batch, 2), out.shape
    assert np.allclose(np.asarray(out, np.float64), ref, atol=5e-3, rtol=5e-3), (
        f"f32 max abs err {np.max(np.abs(np.asarray(out, np.float64) - ref))}")

    # bf16 MXU-operand path (f32 accumulation + f32 elementwise): loose tol.
    out_bf16 = enhanced_linear_regression_forward(
        x, params, compute_dtype=jnp.bfloat16)
    out_bf16 = jax.block_until_ready(out_bf16)
    assert out_bf16.shape == (batch, 2), out_bf16.shape
    assert np.allclose(np.asarray(out_bf16, np.float64), ref, atol=0.25, rtol=0.15), (
        f"bf16 max abs err {np.max(np.abs(np.asarray(out_bf16, np.float64) - ref))}")

    print("KERNEL_OK")
</pallas_src>

<mosaic_0001>
module attributes {stable_mosaic.version = 11 : i64} {
  func.func @_mlp_kernel(%arg0: i32, %arg1: memref<8x32xf32, #tpu.memory_space<vmem>>, %arg2: memref<5x128x128xf32, #tpu.memory_space<vmem>>, %arg3: memref<8x128xf32, #tpu.memory_space<vmem>>, %arg4: memref<8x8xf32, #tpu.memory_space<vmem>>) attributes {dimension_semantics = [#tpu.dimension_semantics<parallel>], iteration_bounds = array<i64: 1>, scalar_prefetch = 0 : i64, scratch_operands = 0 : i64, tpu.core_type = #tpu.core_type<tc>, window_params = [{transform_indices = @transform_0, window_bounds = array<i64: 8, 32>}, {pipeline_mode = #tpu.pipeline_mode<synchronous>, transform_indices = @transform_1, window_bounds = array<i64: 5, 128, 128>}, {pipeline_mode = #tpu.pipeline_mode<synchronous>, transform_indices = @transform_2, window_bounds = array<i64: 8, 128>}, {transform_indices = @transform_3, window_bounds = array<i64: 8, 8>}]} {
    %c0 = arith.constant 0 : index
    %c0_0 = arith.constant 0 : index
    %0 = vector.load %arg1[%c0, %c0_0] : memref<8x32xf32, #tpu.memory_space<vmem>>, vector<8x32xf32>
    %c0_1 = arith.constant 0 : index
    %c0_2 = arith.constant 0 : index
    %c0_3 = arith.constant 0 : index
    %1 = vector.load %arg2[%c0_1, %c0_2, %c0_3] : memref<5x128x128xf32, #tpu.memory_space<vmem>>, vector<1x32x128xf32>
    %2 = vector.shape_cast %1 : vector<1x32x128xf32> to vector<32x128xf32>
    %cst = arith.constant dense<0.000000e+00> : vector<8x128xf32>
    %3 = tpu.matmul %0, %2, %cst {dimension_numbers = #tpu.dot_dimension_numbers<[1], [0], [0], [1], [0, 0, 1, 1], [], []>} : vector<8x32xf32>, vector<32x128xf32>, vector<8x128xf32> -> vector<8x128xf32>
    %c0_4 = arith.constant 0 : index
    %c0_5 = arith.constant 0 : index
    %4 = vector.load %arg3[%c0_4, %c0_5] : memref<8x128xf32, #tpu.memory_space<vmem>>, vector<1x128xf32>
    %5 = vector.broadcast %4 : vector<1x128xf32> to vector<8x128xf32>
    %6 = arith.addf %3, %5 : vector<8x128xf32>
    %cst_6 = arith.constant 0.000000e+00 : f32
    %7 = vector.broadcast %cst_6 : f32 to vector<8x128xf32>
    %8 = arith.maximumf %6, %7 : vector<8x128xf32>
    %c1 = arith.constant 1 : index
    %c0_7 = arith.constant 0 : index
    %c0_8 = arith.constant 0 : index
    %9 = vector.load %arg2[%c1, %c0_7, %c0_8] : memref<5x128x128xf32, #tpu.memory_space<vmem>>, vector<1x128x64xf32>
    %10 = vector.shape_cast %9 : vector<1x128x64xf32> to vector<128x64xf32>
    %cst_9 = arith.constant dense<0.000000e+00> : vector<8x64xf32>
    %11 = tpu.matmul %8, %10, %cst_9 {dimension_numbers = #tpu.dot_dimension_numbers<[1], [0], [0], [1], [0, 0, 1, 1], [], []>} : vector<8x128xf32>, vector<128x64xf32>, vector<8x64xf32> -> vector<8x64xf32>
    %c1_10 = arith.constant 1 : index
    %c0_11 = arith.constant 0 : index
    %12 = vector.load %arg3[%c1_10, %c0_11] : memref<8x128xf32, #tpu.memory_space<vmem>>, vector<1x64xf32>
    %13 = vector.broadcast %12 : vector<1x64xf32> to vector<8x64xf32>
    %14 = arith.addf %11, %13 : vector<8x64xf32>
    %cst_12 = arith.constant 0.000000e+00 : f32
    %15 = vector.broadcast %cst_12 : f32 to vector<8x64xf32>
    %16 = arith.maximumf %14, %15 : vector<8x64xf32>
    %c2 = arith.constant 2 : index
    %c0_13 = arith.constant 0 : index
    %c0_14 = arith.constant 0 : index
    %17 = vector.load %arg2[%c2, %c0_13, %c0_14] : memref<5x128x128xf32, #tpu.memory_space<vmem>>, vector<1x64x32xf32>
    %18 = vector.shape_cast %17 : vector<1x64x32xf32> to vector<64x32xf32>
    %cst_15 = arith.constant dense<0.000000e+00> : vector<8x32xf32>
    %19 = tpu.matmul %16, %18, %cst_15 {dimension_numbers = #tpu.dot_dimension_numbers<[1], [0], [0], [1], [0, 0, 1, 1], [], []>} : vector<8x64xf32>, vector<64x32xf32>, vector<8x32xf32> -> vector<8x32xf32>
    %c2_16 = arith.constant 2 : index
    %c0_17 = arith.constant 0 : index
    %20 = vector.load %arg3[%c2_16, %c0_17] : memref<8x128xf32, #tpu.memory_space<vmem>>, vector<1x32xf32>
    %21 = vector.broadcast %20 : vector<1x32xf32> to vector<8x32xf32>
    %22 = arith.addf %19, %21 : vector<8x32xf32>
    %cst_18 = arith.constant 0.000000e+00 : f32
    %23 = vector.broadcast %cst_18 : f32 to vector<8x32xf32>
    %24 = arith.maximumf %22, %23 : vector<8x32xf32>
    %c3 = arith.constant 3 : index
    %c0_19 = arith.constant 0 : index
    %c0_20 = arith.constant 0 : index
    %25 = vector.load %arg2[%c3, %c0_19, %c0_20] : memref<5x128x128xf32, #tpu.memory_space<vmem>>, vector<1x32x16xf32>
    %26 = vector.shape_cast %25 : vector<1x32x16xf32> to vector<32x16xf32>
    %cst_21 = arith.constant dense<0.000000e+00> : vector<8x16xf32>
    %27 = tpu.matmul %24, %26, %cst_21 {dimension_numbers = #tpu.dot_dimension_numbers<[1], [0], [0], [1], [0, 0, 1, 1], [], []>} : vector<8x32xf32>, vector<32x16xf32>, vector<8x16xf32> -> vector<8x16xf32>
    %c3_22 = arith.constant 3 : index
    %c0_23 = arith.constant 0 : index
    %28 = vector.load %arg3[%c3_22, %c0_23] : memref<8x128xf32, #tpu.memory_space<vmem>>, vector<1x16xf32>
    %29 = vector.broadcast %28 : vector<1x16xf32> to vector<8x16xf32>
    %30 = arith.addf %27, %29 : vector<8x16xf32>
    %cst_24 = arith.constant 0.000000e+00 : f32
    %31 = vector.broadcast %cst_24 : f32 to vector<8x16xf32>
    %32 = arith.maximumf %30, %31 : vector<8x16xf32>
    %c4 = arith.constant 4 : index
    %c0_25 = arith.constant 0 : index
    %c0_26 = arith.constant 0 : index
    %33 = vector.load %arg2[%c4, %c0_25, %c0_26] : memref<5x128x128xf32, #tpu.memory_space<vmem>>, vector<1x16x8xf32>
    %34 = vector.shape_cast %33 : vector<1x16x8xf32> to vector<16x8xf32>
    %cst_27 = arith.constant dense<0.000000e+00> : vector<8x8xf32>
    %35 = tpu.matmul %32, %34, %cst_27 {dimension_numbers = #tpu.dot_dimension_numbers<[1], [0], [0], [1], [0, 0, 1, 1], [], []>} : vector<8x16xf32>, vector<16x8xf32>, vector<8x8xf32> -> vector<8x8xf32>
    %c4_28 = arith.constant 4 : index
    %c0_29 = arith.constant 0 : index
    %36 = vector.load %arg3[%c4_28, %c0_29] : memref<8x128xf32, #tpu.memory_space<vmem>>, vector<1x8xf32>
    %37 = vector.broadcast %36 : vector<1x8xf32> to vector<8x8xf32>
    %38 = arith.addf %35, %37 : vector<8x8xf32>
    %c0_30 = arith.constant 0 : index
    %c0_31 = arith.constant 0 : index
    %39 = vector.load %arg4[%c0_30, %c0_31] : memref<8x8xf32, #tpu.memory_space<vmem>>, vector<8x8xf32>
    tpu.vector_store %arg4[%c0_30, %c0_31], %38 {strides = array<i32>} : memref<8x8xf32, #tpu.memory_space<vmem>>, vector<8x8xf32>,
    return
  }
  func.func @transform_0(%arg0: i32) -> (i32, i32) {
    %c0_i32 = arith.constant 0 : i32
    %c0_i32_0 = arith.constant 0 : i32
    return %arg0, %c0_i32 : i32, i32
  }
  func.func @transform_1(%arg0: i32) -> (i32, i32, i32) {
    %c0_i32 = arith.constant 0 : i32
    %c0_i32_0 = arith.constant 0 : i32
    %c0_i32_1 = arith.constant 0 : i32
    %c0_i32_2 = arith.constant 0 : i32
    return %c0_i32, %c0_i32_0, %c0_i32_1 : i32, i32, i32
  }
  func.func @transform_2(%arg0: i32) -> (i32, i32) {
    %c0_i32 = arith.constant 0 : i32
    %c0_i32_0 = arith.constant 0 : i32
    %c0_i32_1 = arith.constant 0 : i32
    return %c0_i32, %c0_i32_0 : i32, i32
  }
  func.func @transform_3(%arg0: i32) -> (i32, i32) {
    %c0_i32 = arith.constant 0 : i32
    %c0_i32_0 = arith.constant 0 : i32
    return %arg0, %c0_i32 : i32, i32
  }
}

</mosaic_0001>

<llo_original>
// kernel: _mlp_pallas.1
$region0: #{_mlp_pallas.1}
  #allocation0 [shape = 'u32[]', space=smem, size = 0x4, offset = 0x4, fixed_abs, tag = 'smem constant byte address 0x4 - core index']
  #allocation1 [shape = 'u32[144,128]{1,0:T(1,128)}', space=vmem, size = 0x12000, scoped, tag = 'internal scratch']
  %s0 = inlined_call_operand.hbm [shape: f32[8,32], index: 0, kind: input, shape index: {}]
  %s1 = inlined_call_operand.hbm [shape: f32[5,128,128], index: 1, kind: input, shape index: {}]
  %s2 = inlined_call_operand.hbm [shape: f32[8,128], index: 2, kind: input, shape index: {}]
  %s3 = inlined_call_operand.vmem [shape: f32[8,8], index: 3, kind: output, shape index: {}]
  %s4 = sld [smem:[#allocation0]]
  $region34: #{_mlp_pallas.1} parent=0
    _
  %s6 = ssub.s32 1, %s4
  %s7 = scalar_select 0, %s6, %s4
  $region1: #{_mlp_pallas.1} parent=0
    #allocation2 [shape = 'u8[4096]{0}', space=vmem, size = 0x1000, scoped, tag = 'input window, operand 0, single buffered']
    #allocation3 [shape = 's32[1]{0}', space=sflag, size = 0x4, scoped, tag = 'scoped memory for _mlp_pallas.1']
    #allocation4 [shape = 'u8[327680]{0}', space=vmem, size = 0x50000, scoped, tag = 'input window, operand 1, single buffered']
    #allocation5 [shape = 's32[1]{0}', space=sflag, size = 0x4, scoped, tag = 'scoped memory for _mlp_pallas.1']
    #allocation6 [shape = 'u8[4096]{0}', space=vmem, size = 0x1000, scoped, tag = 'input window, operand 2, single buffered']
    %8 = vsyncpa [#allocation3], 0
    %9 = vsyncpa [#allocation5], 0
    // Predicated region
    $region2: #{_mlp_pallas.1} parent=1 // pred_check
      _
    $region3: #{_mlp_pallas.1} parent=1 // pred_check_branch
      %11 = sbr.rel (0) target = $region5
    $region4: #{_mlp_pallas.1} parent=1 // pred_region
      %s13 = ssub.s32 128, 128
      %14 = vsyncadd [#allocation3], %s13
      %s16 = sshll.u32 [#allocation2], 4
      %s17 = int_to_ptr.vmem [resolvable:$true] %s16
      %19 = dma.hbm_to_vmem [thread:$0]  %s0, 128, %s17, [#allocation3]
    $region5: #{_mlp_pallas.1} parent=1 // pred_fallthru
      _
    // Predicated region
    $region6: #{_mlp_pallas.1} parent=1 // pred_check
      _
    $region7: #{_mlp_pallas.1} parent=1 // pred_check_branch
      %21 = sbr.rel (0) target = $region9
    $region8: #{_mlp_pallas.1} parent=1 // pred_region
      %s23 = ssub.s32 10240, 10240
      %24 = vsyncadd [#allocation5], %s23
      %s25 = sshll.u32 [#allocation4], 4
      %s26 = int_to_ptr.vmem [resolvable:$true] %s25
      %31 = dma.hbm_to_vmem [thread:$0]  %s1, 10240, %s26, [#allocation5], 128, 128, 8
    $region9: #{_mlp_pallas.1} parent=1 // pred_fallthru
      _
    // Predicated region
    $region10: #{_mlp_pallas.1} parent=1 // pred_check
      _
    $region11: #{_mlp_pallas.1} parent=1 // pred_check_branch
      %33 = sbr.rel (0) target = $region13
    $region12: #{_mlp_pallas.1} parent=1 // pred_region
      %s35 = ssub.s32 128, 128
      %36 = vsyncadd [#allocation5], %s35
      %s38 = sshll.u32 [#allocation6], 4
      %s39 = int_to_ptr.vmem [resolvable:$true] %s38
      %41 = dma.hbm_to_vmem [thread:$0]  %s2, 128, %s39, [#allocation5]
    $region13: #{_mlp_pallas.1} parent=1 // pred_fallthru
      _
    // Predicated region
    $region14: #{_mlp_pallas.1} parent=1 // pred_check
      _
    $region15: #{_mlp_pallas.1} parent=1 // pred_check_branch
      %43 = sbr.rel (0) target = $region17
    $region16: #{_mlp_pallas.1} parent=1 // pred_region
      %44 = dma.done [#allocation3], 128
    $region17: #{_mlp_pallas.1} parent=1 // pred_fallthru
      _
    // Predicated region
    $region18: #{_mlp_pallas.1} parent=1 // pred_check
      _
    $region19: #{_mlp_pallas.1} parent=1 // pred_check_branch
      %46 = sbr.rel (0) target = $region21
    $region20: #{_mlp_pallas.1} parent=1 // pred_region
      %47 = dma.done [#allocation5], 10240
    $region21: #{_mlp_pallas.1} parent=1 // pred_fallthru
      _
    // Predicated region
    $region22: #{_mlp_pallas.1} parent=1 // pred_check
      _
    $region23: #{_mlp_pallas.1} parent=1 // pred_check_branch
      %49 = sbr.rel (0) target = $region25
    $region24: #{_mlp_pallas.1} parent=1 // pred_region
      %50 = dma.done [#allocation5], 128
    $region25: #{_mlp_pallas.1} parent=1 // pred_fallthru
      _
    %v51 = vld [vmem:[#allocation2] sm:$0xff]
    %v52 = vld [vmem:[#allocation4] sm:$0xff]
    %v53 = vld [vmem:[#allocation4 + $0x8] sm:$0xff]
    %v54 = vld [vmem:[#allocation4 + $0x10] sm:$0xff]
    %v55 = vld [vmem:[#allocation4 + $0x18] sm:$0xff]
    %v56 = vld [vmem:[#allocation6] sm:$0x1]
    %v57 = vlaneseq
    %v58 = vshrl.u32 %v57, 7
    %v59 = vsub.s32 0, %v58
    %v60 = vrot.slane %v56, %v59
    %vm61 = vcmask 261120
    %v63 = vsel %vm61, %v51, 0
    %65 = vmatprep.subr.mxu0 0.0
    %66 = vmatpush1.msra.mxu0 0.0
    %67 = vmatprep.subr.mxu0 0.0
    %68 = vmatpush1.msra.mxu0 0.0
    %69 = vmatprep.subr.mxu0 0.0
    %70 = vmatpush1.msra.mxu0 0.0
    %71 = vmatprep.subr.mxu0 0.0
    %72 = vmatpush1.msra.mxu0 0.0
    %73 = vmatprep.subr.mxu0 0.0
    %74 = vmatpush1.msra.mxu0 0.0
    %75 = vmatprep.subr.mxu0 0.0
    %76 = vmatpush1.msra.mxu0 0.0
    %77 = vmatprep.subr.mxu0 0.0
    %78 = vmatpush1.msra.mxu0 0.0
    %79 = vmatprep.subr.mxu0 0.0
    %80 = vmatpush1.msra.mxu0 0.0
    %81 = vmatprep.subr.mxu0 0.0
    %82 = vmatpush1.msra.mxu0 0.0
    %83 = vmatprep.subr.mxu0 0.0
    %84 = vmatpush1.msra.mxu0 0.0
    %85 = vmatprep.subr.mxu0 0.0
    %86 = vmatpush1.msra.mxu0 0.0
    %87 = vmatprep.subr.mxu0 0.0
    %88 = vmatpush1.msra.mxu0 0.0
    %89 = vmatprep.subr.mxu0 0.0
    %90 = vmatpush1.msra.mxu0 %v55
    %91 = vmatprep.subr.mxu0 0.0
    %92 = vmatpush1.msra.mxu0 %v54
    %93 = vmatprep.subr.mxu0 0.0
    %94 = vmatpush1.msra.mxu0 %v53
    %95 = vmatprep.subr.mxu0 0.0
    %96 = vmatpush1.msra.mxu0 %v52
    %97 = vmatprep.subr.mxu0 0.0
    %98 = vmatpush2.msra.mxu0 0.0
    %99 = vmatprep.subr.mxu0 0.0
    %100 = vmatpush2.msra.mxu0 0.0
    %101 = vmatprep.subr.mxu0 0.0
    %102 = vmatpush2.msra.mxu0 0.0
    %103 = vmatprep.subr.mxu0 0.0
    %104 = vmatpush2.msra.mxu0 0.0
    %105 = vmatprep.subr.mxu0 0.0
    %106 = vmatpush2.msra.mxu0 0.0
    %107 = vmatprep.subr.mxu0 0.0
    %108 = vmatpush2.msra.mxu0 0.0
    %109 = vmatprep.subr.mxu0 0.0
    %110 = vmatpush2.msra.mxu0 0.0
    %111 = vmatprep.subr.mxu0 0.0
    %112 = vmatpush2.msra.mxu0 0.0
    %113 = vmatprep.subr.mxu0 0.0
    %114 = vmatpush2.msra.mxu0 0.0
    %115 = vmatprep.subr.mxu0 0.0
    %116 = vmatpush2.msra.mxu0 0.0
    %117 = vmatprep.subr.mxu0 0.0
    %118 = vmatpush2.msra.mxu0 0.0
    %119 = vmatprep.subr.mxu0 0.0
    %120 = vmatpush2.msra.mxu0 0.0
    %121 = vmatprep.subr.mxu0 0.0
    %122 = vmatpush2.msra.mxu0 0.0
    %123 = vmatprep.subr.mxu0 0.0
    %124 = vmatpush2.msra.mxu0 0.0
    %125 = vmatprep.subr.mxu0 0.0
    %126 = vmatpush2.msra.mxu0 0.0
    %127 = vmatprep.subr.mxu0 0.0
    %128 = vmatpush2.msra.mxu0 0.0
    %129 = vmatprep.mubr.f32.mxu0 0.0
    %130 = vmatmul.mubr.f32.gmra.mxu0 %v63
    %v131 = vpop.f32.mrf.mxu0
    %v132 = vadd.f32 %v60, %v131
    %v133 = vpop.f32.mrf.mxu0
    %134 = vdwg.mxu0
    %v135 = vmax.f32 %v132, 0.0
    %s136 = scalar_lea.vmem [#allocation4], 128
    %v137 = vld [vmem:[%s136] sm:$0xff]
    %v138 = vld [vmem:[%s136 + $0x8] sm:$0xff]
    %v139 = vld [vmem:[%s136 + $0x10] sm:$0xff]
    %v140 = vld [vmem:[%s136 + $0x18] sm:$0xff]
    %v141 = vld [vmem:[%s136 + $0x20] sm:$0xff]
    %v142 = vld [vmem:[%s136 + $0x28] sm:$0xff]
    %v143 = vld [vmem:[%s136 + $0x30] sm:$0xff]
    %v144 = vld [vmem:[%s136 + $0x38] sm:$0xff]
    %v145 = vld [vmem:[%s136 + $0x40] sm:$0xff]
    %v146 = vld [vmem:[%s136 + $0x48] sm:$0xff]
    %v147 = vld [vmem:[%s136 + $0x50] sm:$0xff]
    %v148 = vld [vmem:[%s136 + $0x58] sm:$0xff]
    %v149 = vld [vmem:[%s136 + $0x60] sm:$0xff]
    %v150 = vld [vmem:[%s136 + $0x68] sm:$0xff]
    %v151 = vld [vmem:[%s136 + $0x70] sm:$0xff]
    %v152 = vld [vmem:[%s136 + $0x78] sm:$0xff]
    %v153 = vld [vmem:[#allocation6 + $0x1] sm:$0x1]
    %v154 = vlaneseq
    %v155 = vshrl.u32 %v154, 7
    %v156 = vsub.s32 0, %v155
    %v157 = vrot.slane %v153, %v156
    %158 = vmatprep.subr.mxu0 0.0
    %159 = vmatpush1.msra.mxu0 %v152
    %160 = vmatprep.subr.mxu0 0.0
    %161 = vmatpush1.msra.mxu0 %v151
    %162 = vmatprep.subr.mxu0 0.0
    %163 = vmatpush1.msra.mxu0 %v150
    %164 = vmatprep.subr.mxu0 0.0
    %165 = vmatpush1.msra.mxu0 %v149
    %166 = vmatprep.subr.mxu0 0.0
    %167 = vmatpush1.msra.mxu0 %v148
    %168 = vmatprep.subr.mxu0 0.0
    %169 = vmatpush1.msra.mxu0 %v147
    %170 = vmatprep.subr.mxu0 0.0
    %171 = vmatpush1.msra.mxu0 %v146
    %172 = vmatprep.subr.mxu0 0.0
    %173 = vmatpush1.msra.mxu0 %v145
    %174 = vmatprep.subr.mxu0 0.0
    %175 = vmatpush1.msra.mxu0 %v144
    %176 = vmatprep.subr.mxu0 0.0
    %177 = vmatpush1.msra.mxu0 %v143
    %178 = vmatprep.subr.mxu0 0.0
    %179 = vmatpush1.msra.mxu0 %v142
    %180 = vmatprep.subr.mxu0 0.0
    %181 = vmatpush1.msra.mxu0 %v141
    %182 = vmatprep.subr.mxu0 0.0
    %183 = vmatpush1.msra.mxu0 %v140
    %184 = vmatprep.subr.mxu0 0.0
    %185 = vmatpush1.msra.mxu0 %v139
    %186 = vmatprep.subr.mxu0 0.0
    %187 = vmatpush1.msra.mxu0 %v138
    %188 = vmatprep.subr.mxu0 0.0
    %189 = vmatpush1.msra.mxu0 %v137
    %190 = vmatprep.subr.mxu0 0.0
    %191 = vmatpush2.msra.mxu0 0.0
    %192 = vmatprep.subr.mxu0 0.0
    %193 = vmatpush2.msra.mxu0 0.0
    %194 = vmatprep.subr.mxu0 0.0
    %195 = vmatpush2.msra.mxu0 0.0
    %196 = vmatprep.subr.mxu0 0.0
    %197 = vmatpush2.msra.mxu0 0.0
    %198 = vmatprep.subr.mxu0 0.0
    %199 = vmatpush2.msra.mxu0 0.0
    %200 = vmatprep.subr.mxu0 0.0
    %201 = vmatpush2.msra.mxu0 0.0
    %202 = vmatprep.subr.mxu0 0.0
    %203 = vmatpush2.msra.mxu0 0.0
    %204 = vmatprep.subr.mxu0 0.0
    %205 = vmatpush2.msra.mxu0 0.0
    %206 = vmatprep.subr.mxu0 0.0
    %207 = vmatpush2.msra.mxu0 0.0
    %208 = vmatprep.subr.mxu0 0.0
    %209 = vmatpush2.msra.mxu0 0.0
    %210 = vmatprep.subr.mxu0 0.0
    %211 = vmatpush2.msra.mxu0 0.0
    %212 = vmatprep.subr.mxu0 0.0
    %213 = vmatpush2.msra.mxu0 0.0
    %214 = vmatprep.subr.mxu0 0.0
    %215 = vmatpush2.msra.mxu0 0.0
    %216 = vmatprep.subr.mxu0 0.0
    %217 = vmatpush2.msra.mxu0 0.0
    %218 = vmatprep.subr.mxu0 0.0
    %219 = vmatpush2.msra.mxu0 0.0
    %220 = vmatprep.subr.mxu0 0.0
    %221 = vmatpush2.msra.mxu0 0.0
    %222 = vmatprep.mubr.f32.mxu0 0.0
    %223 = vmatmul.mubr.f32.gmra.mxu0 %v135
    %v224 = vpop.f32.mrf.mxu0
    %v225 = vadd.f32 %v157, %v224
    %v226 = vpop.f32.mrf.mxu0
    %227 = vdwg.mxu0
    %v228 = vmax.f32 %v225, 0.0
    %s229 = scalar_lea.vmem [#allocation4], 256
    %v230 = vld [vmem:[%s229] sm:$0xff]
    %v231 = vld [vmem:[%s229 + $0x8] sm:$0xff]
    %v232 = vld [vmem:[%s229 + $0x10] sm:$0xff]
    %v233 = vld [vmem:[%s229 + $0x18] sm:$0xff]
    %v234 = vld [vmem:[%s229 + $0x20] sm:$0xff]
    %v235 = vld [vmem:[%s229 + $0x28] sm:$0xff]
    %v236 = vld [vmem:[%s229 + $0x30] sm:$0xff]
    %v237 = vld [vmem:[%s229 + $0x38] sm:$0xff]
    %v238 = vld [vmem:[#allocation6 + $0x2] sm:$0x1]
    %v239 = vlaneseq
    %v240 = vshrl.u32 %v239, 7
    %v241 = vsub.s32 0, %v240
    %v242 = vrot.slane %v238, %v241
    %vm243 = vcmask 523264
    %v245 = vsel %vm243, %v228, 0
    %247 = vmatprep.subr.mxu0 0.0
    %248 = vmatpush1.msra.mxu0 0.0
    %249 = vmatprep.subr.mxu0 0.0
    %250 = vmatpush1.msra.mxu0 0.0
    %251 = vmatprep.subr.mxu0 0.0
    %252 = vmatpush1.msra.mxu0 0.0
    %253 = vmatprep.subr.mxu0 0.0
    %254 = vmatpush1.msra.mxu0 0.0
    %255 = vmatprep.subr.mxu0 0.0
    %256 = vmatpush1.msra.mxu0 0.0
    %257 = vmatprep.subr.mxu0 0.0
    %258 = vmatpush1.msra.mxu0 0.0
    %259 = vmatprep.subr.mxu0 0.0
    %260 = vmatpush1.msra.mxu0 0.0
    %261 = vmatprep.subr.mxu0 0.0
    %262 = vmatpush1.msra.mxu0 0.0
    %263 = vmatprep.subr.mxu0 0.0
    %264 = vmatpush1.msra.mxu0 %v237
    %265 = vmatprep.subr.mxu0 0.0
    %266 = vmatpush1.msra.mxu0 %v236
    %267 = vmatprep.subr.mxu0 0.0
    %268 = vmatpush1.msra.mxu0 %v235
    %269 = vmatprep.subr.mxu0 0.0
    %270 = vmatpush1.msra.mxu0 %v234
    %271 = vmatprep.subr.mxu0 0.0
    %272 = vmatpush1.msra.mxu0 %v233
    %273 = vmatprep.subr.mxu0 0.0
    %274 = vmatpush1.msra.mxu0 %v232
    %275 = vmatprep.subr.mxu0 0.0
    %276 = vmatpush1.msra.mxu0 %v231
    %277 = vmatprep.subr.mxu0 0.0
    %278 = vmatpush1.msra.mxu0 %v230
    %279 = vmatprep.subr.mxu0 0.0
    %280 = vmatpush2.msra.mxu0 0.0
    %281 = vmatprep.subr.mxu0 0.0
    %282 = vmatpush2.msra.mxu0 0.0
    %283 = vmatprep.subr.mxu0 0.0
    %284 = vmatpush2.msra.mxu0 0.0
    %285 = vmatprep.subr.mxu0 0.0
    %286 = vmatpush2.msra.mxu0 0.0
    %287 = vmatprep.subr.mxu0 0.0
    %288 = vmatpush2.msra.mxu0 0.0
    %289 = vmatprep.subr.mxu0 0.0
    %290 = vmatpush2.msra.mxu0 0.0
    %291 = vmatprep.subr.mxu0 0.0
    %292 = vmatpush2.msra.mxu0 0.0
    %293 = vmatprep.subr.mxu0 0.0
    %294 = vmatpush2.msra.mxu0 0.0
    %295 = vmatprep.subr.mxu0 0.0
    %296 = vmatpush2.msra.mxu0 0.0
    %297 = vmatprep.subr.mxu0 0.0
    %298 = vmatpush2.msra.mxu0 0.0
    %299 = vmatprep.subr.mxu0 0.0
    %300 = vmatpush2.msra.mxu0 0.0
    %301 = vmatprep.subr.mxu0 0.0
    %302 = vmatpush2.msra.mxu0 0.0
    %303 = vmatprep.subr.mxu0 0.0
    %304 = vmatpush2.msra.mxu0 0.0
    %305 = vmatprep.subr.mxu0 0.0
    %306 = vmatpush2.msra.mxu0 0.0
    %307 = vmatprep.subr.mxu0 0.0
    %308 = vmatpush2.msra.mxu0 0.0
    %309 = vmatprep.subr.mxu0 0.0
    %310 = vmatpush2.msra.mxu0 0.0
    %311 = vmatprep.mubr.f32.mxu0 0.0
    %312 = vmatmul.mubr.f32.gmra.mxu0 %v245
    %v313 = vpop.f32.mrf.mxu0
    %v314 = vadd.f32 %v242, %v313
    %v315 = vpop.f32.mrf.mxu0
    %316 = vdwg.mxu0
    %v317 = vmax.f32 %v314, 0.0
    %s318 = scalar_lea.vmem [#allocation4], 384
    %v319 = vld [vmem:[%s318] sm:$0xff]
    %v320 = vld [vmem:[%s318 + $0x8] sm:$0xff]
    %v321 = vld [vmem:[%s318 + $0x10] sm:$0xff]
    %v322 = vld [vmem:[%s318 + $0x18] sm:$0xff]
    %v323 = vld [vmem:[#allocation6 + $0x3] sm:$0x1]
    %v324 = vlaneseq
    %v325 = vshrl.u32 %v324, 7
    %v326 = vsub.s32 0, %v325
    %v327 = vrot.slane %v323, %v326
    %v329 = vsel %vm61, %v317, 0
    %331 = vmatprep.subr.mxu0 0.0
    %332 = vmatpush1.msra.mxu0 0.0
    %333 = vmatprep.subr.mxu0 0.0
    %334 = vmatpush1.msra.mxu0 0.0
    %335 = vmatprep.subr.mxu0 0.0
    %336 = vmatpush1.msra.mxu0 0.0
    %337 = vmatprep.subr.mxu0 0.0
    %338 = vmatpush1.msra.mxu0 0.0
    %339 = vmatprep.subr.mxu0 0.0
    %340 = vmatpush1.msra.mxu0 0.0
    %341 = vmatprep.subr.mxu0 0.0
    %342 = vmatpush1.msra.mxu0 0.0
    %343 = vmatprep.subr.mxu0 0.0
    %344 = vmatpush1.msra.mxu0 0.0
    %345 = vmatprep.subr.mxu0 0.0
    %346 = vmatpush1.msra.mxu0 0.0
    %347 = vmatprep.subr.mxu0 0.0
    %348 = vmatpush1.msra.mxu0 0.0
    %349 = vmatprep.subr.mxu0 0.0
    %350 = vmatpush1.msra.mxu0 0.0
    %351 = vmatprep.subr.mxu0 0.0
    %352 = vmatpush1.msra.mxu0 0.0
    %353 = vmatprep.subr.mxu0 0.0
    %354 = vmatpush1.msra.mxu0 0.0
    %355 = vmatprep.subr.mxu0 0.0
    %356 = vmatpush1.msra.mxu0 %v322
    %357 = vmatprep.subr.mxu0 0.0
    %358 = vmatpush1.msra.mxu0 %v321
    %359 = vmatprep.subr.mxu0 0.0
    %360 = vmatpush1.msra.mxu0 %v320
    %361 = vmatprep.subr.mxu0 0.0
    %362 = vmatpush1.msra.mxu0 %v319
    %363 = vmatprep.subr.mxu0 0.0
    %364 = vmatpush2.msra.mxu0 0.0
    %365 = vmatprep.subr.mxu0 0.0
    %366 = vmatpush2.msra.mxu0 0.0
    %367 = vmatprep.subr.mxu0 0.0
    %368 = vmatpush2.msra.mxu0 0.0
    %369 = vmatprep.subr.mxu0 0.0
    %370 = vmatpush2.msra.mxu0 0.0
    %371 = vmatprep.subr.mxu0 0.0
    %372 = vmatpush2.msra.mxu0 0.0
    %373 = vmatprep.subr.mxu0 0.0
    %374 = vmatpush2.msra.mxu0 0.0
    %375 = vmatprep.subr.mxu0 0.0
    %376 = vmatpush2.msra.mxu0 0.0
    %377 = vmatprep.subr.mxu0 0.0
    %378 = vmatpush2.msra.mxu0 0.0
    %379 = vmatprep.subr.mxu0 0.0
    %380 = vmatpush2.msra.mxu0 0.0
    %381 = vmatprep.subr.mxu0 0.0
    %382 = vmatpush2.msra.mxu0 0.0
    %383 = vmatprep.subr.mxu0 0.0
    %384 = vmatpush2.msra.mxu0 0.0
    %385 = vmatprep.subr.mxu0 0.0
    %386 = vmatpush2.msra.mxu0 0.0
    %387 = vmatprep.subr.mxu0 0.0
    %388 = vmatpush2.msra.mxu0 0.0
    %389 = vmatprep.subr.mxu0 0.0
    %390 = vmatpush2.msra.mxu0 0.0
    %391 = vmatprep.subr.mxu0 0.0
    %392 = vmatpush2.msra.mxu0 0.0
    %393 = vmatprep.subr.mxu0 0.0
    %394 = vmatpush2.msra.mxu0 0.0
    %395 = vmatprep.mubr.f32.mxu0 0.0
    %396 = vmatmul.mubr.f32.gmra.mxu0 %v329
    %v397 = vpop.f32.mrf.mxu0
    %v398 = vadd.f32 %v327, %v397
    %v399 = vpop.f32.mrf.mxu0
    %400 = vdwg.mxu0
    %v401 = vmax.f32 %v398, 0.0
    %s402 = scalar_lea.vmem [#allocation4], 512
    %v403 = vld [vmem:[%s402] sm:$0xff]
    %v404 = vld [vmem:[%s402 + $0x8] sm:$0xff]
    %v405 = vld [vmem:[#allocation6 + $0x4] sm:$0x1]
    %v406 = vlaneseq
    %v407 = vshrl.u32 %v406, 7
    %v408 = vsub.s32 0, %v407
    %v409 = vrot.slane %v405, %v408
    %vm410 = vcmask 130048
    %v412 = vsel %vm410, %v401, 0
    %414 = vmatprep.subr.mxu0 0.0
    %415 = vmatpush1.msra.mxu0 0.0
    %416 = vmatprep.subr.mxu0 0.0
    %417 = vmatpush1.msra.mxu0 0.0
    %418 = vmatprep.subr.mxu0 0.0
    %419 = vmatpush1.msra.mxu0 0.0
    %420 = vmatprep.subr.mxu0 0.0
    %421 = vmatpush1.msra.mxu0 0.0
    %422 = vmatprep.subr.mxu0 0.0
    %423 = vmatpush1.msra.mxu0 0.0
    %424 = vmatprep.subr.mxu0 0.0
    %425 = vmatpush1.msra.mxu0 0.0
    %426 = vmatprep.subr.mxu0 0.0
    %427 = vmatpush1.msra.mxu0 0.0
    %428 = vmatprep.subr.mxu0 0.0
    %429 = vmatpush1.msra.mxu0 0.0
    %430 = vmatprep.subr.mxu0 0.0
    %431 = vmatpush1.msra.mxu0 0.0
    %432 = vmatprep.subr.mxu0 0.0
    %433 = vmatpush1.msra.mxu0 0.0
    %434 = vmatprep.subr.mxu0 0.0
    %435 = vmatpush1.msra.mxu0 0.0
    %436 = vmatprep.subr.mxu0 0.0
    %437 = vmatpush1.msra.mxu0 0.0
    %438 = vmatprep.subr.mxu0 0.0
    %439 = vmatpush1.msra.mxu0 0.0
    %440 = vmatprep.subr.mxu0 0.0
    %441 = vmatpush1.msra.mxu0 0.0
    %442 = vmatprep.subr.mxu0 0.0
    %443 = vmatpush1.msra.mxu0 %v404
    %444 = vmatprep.subr.mxu0 0.0
    %445 = vmatpush1.msra.mxu0 %v403
    %446 = vmatprep.subr.mxu0 0.0
    %447 = vmatpush2.msra.mxu0 0.0
    %448 = vmatprep.subr.mxu0 0.0
    %449 = vmatpush2.msra.mxu0 0.0
    %450 = vmatprep.subr.mxu0 0.0
    %451 = vmatpush2.msra.mxu0 0.0
    %452 = vmatprep.subr.mxu0 0.0
    %453 = vmatpush2.msra.mxu0 0.0
    %454 = vmatprep.subr.mxu0 0.0
    %455 = vmatpush2.msra.mxu0 0.0
    %456 = vmatprep.subr.mxu0 0.0
    %457 = vmatpush2.msra.mxu0 0.0
    %458 = vmatprep.subr.mxu0 0.0
    %459 = vmatpush2.msra.mxu0 0.0
    %460 = vmatprep.subr.mxu0 0.0
    %461 = vmatpush2.msra.mxu0 0.0
    %462 = vmatprep.subr.mxu0 0.0
    %463 = vmatpush2.msra.mxu0 0.0
    %464 = vmatprep.subr.mxu0 0.0
    %465 = vmatpush2.msra.mxu0 0.0
    %466 = vmatprep.subr.mxu0 0.0
    %467 = vmatpush2.msra.mxu0 0.0
    %468 = vmatprep.subr.mxu0 0.0
    %469 = vmatpush2.msra.mxu0 0.0
    %470 = vmatprep.subr.mxu0 0.0
    %471 = vmatpush2.msra.mxu0 0.0
    %472 = vmatprep.subr.mxu0 0.0
    %473 = vmatpush2.msra.mxu0 0.0
    %474 = vmatprep.subr.mxu0 0.0
    %475 = vmatpush2.msra.mxu0 0.0
    %476 = vmatprep.subr.mxu0 0.0
    %477 = vmatpush2.msra.mxu0 0.0
    %478 = vmatprep.mubr.f32.mxu0 0.0
    %479 = vmatmul.mubr.f32.gmra.mxu0 %v412
    %v480 = vpop.f32.mrf.mxu0
    %v481 = vadd.f32 %v409, %v480
    %v482 = vpop.f32.mrf.mxu0
    %483 = vdwg.mxu0
    %vm484 = vcmask 64512
    %485 = vst.msk [vmem:[%s3] sm:$0xff] %vm484, %v481
    // Predicated region
    $region26: #{_mlp_pallas.1} parent=1 // pred_check
      _
    $region27: #{_mlp_pallas.1} parent=1 // pred_check_branch
      %487 = sbr.rel (0) target = $region29
    $region28: #{_mlp_pallas.1} parent=1 // pred_region
      _
    $region29: #{_mlp_pallas.1} parent=1 // pred_fallthru
      _
    // Predicated region
    $region30: #{_mlp_pallas.1} parent=1 // pred_check
      _
    $region31: #{_mlp_pallas.1} parent=1 // pred_check_branch
      %489 = sbr.rel (0) target = $region33
    $region32: #{_mlp_pallas.1} parent=1 // pred_region
      _
    $region33: #{_mlp_pallas.1} parent=1 // pred_fallthru
      _
    %490 = vsyncpa [#allocation3], 1
    %491 = vsyncpa [#allocation5], 1

</llo_original>
